<compile_context>
chip_gen: v7x
topology: tpu7x:2x2x1
jax: 0.10.0
libtpu: 0.0.40
codegen_flags: <defaults>
</compile_context>

<pallas_src>
import jax
import jax.numpy as jnp
from jax import lax
from jax.experimental import pallas as pl
from jax.experimental.pallas import tpu as pltpu

LANES = 128


def _is_v7x() -> bool:
    """Best-effort detection of a 2-TensorCore (v7x) chip."""
    try:
        kind = jax.devices()[0].device_kind.lower()
    except Exception:
        return False
    return ("v7" in kind) or ("7x" in kind)


def _choose_block_rows(rows: int, itemsize: int, is_v7x: bool) -> int:
    """Rows per block: ~2 MiB/input (4 MiB on v7x), acc capped at 4/8 MiB."""
    in_budget = (4 if is_v7x else 2) << 20          # bytes per input block
    acc_budget = (8 if is_v7x else 4) << 20         # f32 block-shaped accumulator
    br = min(in_budget // (LANES * max(itemsize, 1)),
             acc_budget // (LANES * 4))
    br = max(32, (br // 32) * 32)                   # multiple of 32 -> dtype-robust tiling
    if rows <= br:
        return rows                                 # single block == full sublane extent
    return int(br)


def _make_mse_kernel(block_rows: int, nb_per_core: int, rows_valid: int,
                     num_full_blocks: int, needs_mask: bool):
    def kernel(o_ref, t_ref, out_ref, acc_ref):
        c = pl.program_id(0)
        i = pl.program_id(1)

        @pl.when(i == 0)
        def _():
            acc_ref[...] = jnp.zeros_like(acc_ref)

        d = o_ref[...].astype(jnp.float32) - t_ref[...].astype(jnp.float32)
        sq = d * d

        if needs_mask:
            blk = c * nb_per_core + i

            # Common path: fully-valid block -> pure VPU add, no mask.
            @pl.when(blk < num_full_blocks)
            def _():
                acc_ref[...] += sq

            # Cold path: partial last block or clamped redundant block.
            @pl.when(blk >= num_full_blocks)
            def _():
                row_ids = blk * block_rows + lax.broadcasted_iota(
                    jnp.int32, (block_rows, LANES), 0)
                acc_ref[...] += jnp.where(row_ids < rows_valid, sq, 0.0)
        else:
            acc_ref[...] += sq

        @pl.when(i == pl.num_programs(1) - 1)
        def _():
            out_ref[...] = jnp.sum(acc_ref[...]).reshape(1, 1)

    return kernel


def _sum_sq_diff_2d(o2d: jax.Array, t2d: jax.Array, rows: int) -> jax.Array:
    """Sum of squared differences over a (rows, 128) slab via Pallas."""
    itemsize = max(o2d.dtype.itemsize, t2d.dtype.itemsize)
    is_v7x = _is_v7x()

    block_rows = _choose_block_rows(rows, itemsize, is_v7x)
    nb_total = pl.cdiv(rows, block_rows)
    num_splits = min(2, nb_total) if is_v7x else 1      # 2-way split only on v7x
    nb_per_core = pl.cdiv(nb_total, num_splits)
    num_full_blocks = rows // block_rows
    needs_mask = (num_full_blocks != nb_total) or (num_splits * nb_per_core != nb_total)

    def in_index_map(c, i):
        # Clamp so redundant blocks (second core when nb_total is odd) still
        # issue in-bounds DMAs; they are fully masked in the kernel.
        return (jnp.minimum(c * nb_per_core + i, nb_total - 1), 0)

    partials = pl.pallas_call(
        _make_mse_kernel(block_rows, nb_per_core, rows, num_full_blocks, needs_mask),
        out_shape=jax.ShapeDtypeStruct((num_splits, 1), jnp.float32),
        grid_spec=pltpu.PrefetchScalarGridSpec(
            num_scalar_prefetch=0,
            grid=(num_splits, nb_per_core),
            in_specs=[
                pl.BlockSpec((block_rows, LANES), in_index_map),
                pl.BlockSpec((block_rows, LANES), in_index_map),
            ],
            out_specs=pl.BlockSpec((1, 1), lambda c, i: (c, 0)),
            scratch_shapes=[pltpu.VMEM((block_rows, LANES), jnp.float32)],
        ),
        compiler_params=pltpu.CompilerParams(
            dimension_semantics=("parallel", "arbitrary"),
        ),
    )(o2d, t2d)
    return jnp.sum(partials)


def mse_loss(output: jax.Array, target: jax.Array) -> jax.Array:
    """Equivalent of nn.MSELoss()(output, target): mean of squared differences."""
    assert output.shape == target.shape, "shapes must match (no broadcasting)"
    n = output.size

    o_flat = output.reshape(-1)
    t_flat = target.reshape(-1)

    rows = n // LANES
    if rows >= 8:
        n_main = rows * LANES
        # When n % 128 == 0 (the common case) these are pure reshapes (no copy);
        # for ragged n XLA materializes the prefix slice -- keep sizes aligned.
        o2d = o_flat[:n_main].reshape(rows, LANES)
        t2d = t_flat[:n_main].reshape(rows, LANES)
        main_sum = _sum_sq_diff_2d(o2d, t2d, rows)
        tail_start = n_main
    else:
        main_sum = jnp.float32(0.0)
        tail_start = 0

    # Ragged tail (< 128 elements, or everything when rows < 8): plain JAX.
    if tail_start < n:
        dt = (o_flat[tail_start:].astype(jnp.float32)
              - t_flat[tail_start:].astype(jnp.float32))
        tail_sum = jnp.sum(dt * dt)
    else:
        tail_sum = jnp.float32(0.0)

    # n == 0 yields NaN, matching torch.nn.MSELoss on empty inputs.
    return (main_sum + tail_sum) / jnp.float32(n)


if __name__ == "__main__":
    key = jax.random.PRNGKey(0)
    k1, k2 = jax.random.split(key)

    # Small NCHW shapes consistent with a typical conv-net output/target pair.
    B, C, H, W = 2, 4, 16, 16
    output = jax.random.normal(k1, (B, C, H, W), dtype=jnp.float32)
    target = jax.random.normal(k2, (B, C, H, W), dtype=jnp.float32)

    loss = mse_loss(output, target)
    jax.block_until_ready(loss)

    # Cross-check against plain JAX reference.
    ref = jnp.mean((output.astype(jnp.float32) - target.astype(jnp.float32)) ** 2)
    assert jnp.allclose(loss, ref, rtol=1e-5, atol=1e-6), (loss, ref)

    print("KERNEL_OK")
</pallas_src>

<mosaic_0001>
module attributes {stable_mosaic.version = 11 : i64} {
  func.func @kernel(%arg0: i32, %arg1: i32, %arg2: memref<16x128xf32, #tpu.memory_space<vmem>>, %arg3: memref<16x128xf32, #tpu.memory_space<vmem>>, %arg4: memref<1x1xf32, #tpu.memory_space<vmem>>, %arg5: memref<16x128xf32, #tpu.memory_space<vmem>>) attributes {dimension_semantics = [#tpu.dimension_semantics<parallel>, #tpu.dimension_semantics<arbitrary>], iteration_bounds = array<i64: 1, 1>, scalar_prefetch = 0 : i64, scratch_operands = 1 : i64, tpu.core_type = #tpu.core_type<tc>, window_params = [{transform_indices = @transform_0, window_bounds = array<i64: 16, 128>}, {transform_indices = @transform_1, window_bounds = array<i64: 16, 128>}, {transform_indices = @transform_2, window_bounds = array<i64: 1, 1>}]} {
    %c0_i32 = arith.constant 0 : i32
    %0 = arith.cmpi eq, %arg1, %c0_i32 : i32
    %1 = arith.extui %0 : i1 to i32
    %c0_i32_0 = arith.constant 0 : i32
    %2 = arith.cmpi ne, %1, %c0_i32_0 : i32
    scf.if %2 {
      %cst = arith.constant 0.000000e+00 : f32
      %13 = vector.broadcast %cst : f32 to vector<16x128xf32>
      %c0_10 = arith.constant 0 : index
      %c0_11 = arith.constant 0 : index
      %14 = vector.load %arg5[%c0_10, %c0_11] : memref<16x128xf32, #tpu.memory_space<vmem>>, vector<16x128xf32>
      tpu.vector_store %arg5[%c0_10, %c0_11], %13 {strides = array<i32>} : memref<16x128xf32, #tpu.memory_space<vmem>>, vector<16x128xf32>,
    } else {
    }
    %c0 = arith.constant 0 : index
    %c0_1 = arith.constant 0 : index
    %3 = vector.load %arg2[%c0, %c0_1] : memref<16x128xf32, #tpu.memory_space<vmem>>, vector<16x128xf32>
    %c0_2 = arith.constant 0 : index
    %c0_3 = arith.constant 0 : index
    %4 = vector.load %arg3[%c0_2, %c0_3] : memref<16x128xf32, #tpu.memory_space<vmem>>, vector<16x128xf32>
    %5 = arith.subf %3, %4 : vector<16x128xf32>
    %6 = arith.mulf %5, %5 : vector<16x128xf32>
    %c0_4 = arith.constant 0 : index
    %c0_5 = arith.constant 0 : index
    %7 = vector.load %arg5[%c0_4, %c0_5] : memref<16x128xf32, #tpu.memory_space<vmem>>, vector<16x128xf32>
    %8 = arith.addf %7, %6 : vector<16x128xf32>
    %c0_6 = arith.constant 0 : index
    %c0_7 = arith.constant 0 : index
    %9 = vector.load %arg5[%c0_6, %c0_7] : memref<16x128xf32, #tpu.memory_space<vmem>>, vector<16x128xf32>
    tpu.vector_store %arg5[%c0_6, %c0_7], %8 {strides = array<i32>} : memref<16x128xf32, #tpu.memory_space<vmem>>, vector<16x128xf32>,
    %c0_i32_8 = arith.constant 0 : i32
    %10 = arith.cmpi eq, %arg1, %c0_i32_8 : i32
    %11 = arith.extui %10 : i1 to i32
    %c0_i32_9 = arith.constant 0 : i32
    %12 = arith.cmpi ne, %11, %c0_i32_9 : i32
    scf.if %12 {
      %c0_10 = arith.constant 0 : index
      %c0_11 = arith.constant 0 : index
      %13 = vector.load %arg5[%c0_10, %c0_11] : memref<16x128xf32, #tpu.memory_space<vmem>>, vector<16x128xf32>
      %14 = vector.shape_cast %13 : vector<16x128xf32> to vector<1x16x128xf32>
      %cst = arith.constant dense<0.000000e+00> : vector<1xf32>
      %15 = vector.multi_reduction <add>, %14, %cst [1, 2] : vector<1x16x128xf32> to vector<1xf32>
      %16 = vector.shape_cast %15 : vector<1xf32> to vector<1x1x1xf32>
      %17 = vector.extract %16[0, 0, 0] : f32 from vector<1x1x1xf32>
      %18 = vector.broadcast %17 : f32 to vector<1x1xf32>
      %c0_12 = arith.constant 0 : index
      %c0_13 = arith.constant 0 : index
      %19 = vector.load %arg4[%c0_12, %c0_13] : memref<1x1xf32, #tpu.memory_space<vmem>>, vector<1x1xf32>
      tpu.vector_store %arg4[%c0_12, %c0_13], %18 {strides = array<i32>} : memref<1x1xf32, #tpu.memory_space<vmem>>, vector<1x1xf32>,
    } else {
    }
    return
  }
  func.func @transform_0(%arg0: i32, %arg1: i32) -> (i32, i32) {
    %c1_i32 = arith.constant 1 : i32
    %0 = arith.muli %arg0, %c1_i32 : i32
    %1 = arith.addi %0, %arg1 : i32
    %c0_i32 = arith.constant 0 : i32
    %2 = arith.minsi %1, %c0_i32 : i32
    %c0_i32_0 = arith.constant 0 : i32
    %c0_i32_1 = arith.constant 0 : i32
    return %2, %c0_i32_0 : i32, i32
  }
  func.func @transform_1(%arg0: i32, %arg1: i32) -> (i32, i32) {
    %c1_i32 = arith.constant 1 : i32
    %0 = arith.muli %arg0, %c1_i32 : i32
    %1 = arith.addi %0, %arg1 : i32
    %c0_i32 = arith.constant 0 : i32
    %2 = arith.minsi %1, %c0_i32 : i32
    %c0_i32_0 = arith.constant 0 : i32
    %c0_i32_1 = arith.constant 0 : i32
    return %2, %c0_i32_0 : i32, i32
  }
  func.func @transform_2(%arg0: i32, %arg1: i32) -> (i32, i32) {
    %c0_i32 = arith.constant 0 : i32
    %c0_i32_0 = arith.constant 0 : i32
    return %arg0, %c0_i32 : i32, i32
  }
}

</mosaic_0001>

<llo_original>
// kernel: tpu_custom_call.1
$region0: #{tpu_custom_call.1}
  #allocation0 [shape = 'u32[]', space=smem, size = 0x4, offset = 0x4, fixed_abs, tag = 'smem constant byte address 0x4 - core index']
  #allocation1 [shape = 'u32[144,128]{1,0:T(1,128)}', space=vmem, size = 0x12000, scoped, tag = 'internal scratch']
  #allocation2 [shape = 'f32[16,128]{1,0:T(8,128)}', space=vmem, size = 0x2000, scoped, tag = 'scratch operand']
  %s0 = inlined_call_operand.hbm [shape: f32[16,128], index: 0, kind: input, shape index: {}]
  %s1 = inlined_call_operand.hbm [shape: f32[16,128], index: 1, kind: input, shape index: {}]
  %s2 = inlined_call_operand.hbm [shape: f32[1,1], index: 2, kind: output, shape index: {}]
  %s3 = sld [smem:[#allocation0]]
  $region34: #{tpu_custom_call.1} parent=0
    _
  %s5 = ssub.s32 1, %s3
  %s6 = scalar_select 0, %s5, %s3
  $region1: #{tpu_custom_call.1} parent=0
    #allocation3 [shape = 'u8[8192]{0}', space=vmem, size = 0x2000, scoped, tag = 'input window, operand 0, single buffered']
    #allocation4 [shape = 's32[1]{0}', space=sflag, size = 0x4, scoped, tag = 'scoped memory for tpu_custom_call.1']
    #allocation5 [shape = 's32[1]{0}', space=sflag, size = 0x4, scoped, tag = 'scoped memory for tpu_custom_call.1']
    #allocation6 [shape = 'u8[8192]{0}', space=vmem, size = 0x2000, scoped, tag = 'input window, operand 1, single buffered']
    #allocation7 [shape = 's32[1]{0}', space=sflag, size = 0x4, scoped, tag = 'scoped memory for tpu_custom_call.1']
    #allocation8 [shape = 'u8[512]{0}', space=vmem, size = 0x400, scoped, tag = 'output window, operand 0, single buffered']
    %7 = vsyncpa [#allocation4], 0
    %8 = vsyncpa [#allocation7], 0
    %9 = vsyncpa [#allocation5], 0
    // Predicated region
    $region2: #{tpu_custom_call.1} parent=1 // pred_check
      _
    $region3: #{tpu_custom_call.1} parent=1 // pred_check_branch
      %11 = sbr.rel (0) target = $region5
    $region4: #{tpu_custom_call.1} parent=1 // pred_region
      %s12 = sadd.s32 0, 0
      %p13 = scmp.lt.s32.totalorder %s12, 0
      %s14 = scalar_select %p13, %s12, 0
      %s15 = smul.u32 2, %s14
      %s17 = ssub.s32 256, 256
      %18 = vsyncadd [#allocation4], %s17
      %s19 = smul.addr %s15, 128
      %s20 = scalar_lea.hbm %s0, %s19
      %s21 = sshll.u32 [#allocation3], 4
      %s22 = int_to_ptr.vmem [resolvable:$true] %s21
      %27 = dma.hbm_to_vmem [thread:$0]  %s20, 256, %s22, [#allocation4], 128, 128, 8
    $region5: #{tpu_custom_call.1} parent=1 // pred_fallthru
      _
    // Predicated region
    $region6: #{tpu_custom_call.1} parent=1 // pred_check
      _
    $region7: #{tpu_custom_call.1} parent=1 // pred_check_branch
      %29 = sbr.rel (0) target = $region9
    $region8: #{tpu_custom_call.1} parent=1 // pred_region
      %s30 = sadd.s32 0, 0
      %p31 = scmp.lt.s32.totalorder %s30, 0
      %s32 = scalar_select %p31, %s30, 0
      %s33 = smul.u32 2, %s32
      %s35 = ssub.s32 256, 256
      %36 = vsyncadd [#allocation7], %s35
      %s37 = smul.addr %s33, 128
      %s38 = scalar_lea.hbm %s1, %s37
      %s39 = sshll.u32 [#allocation6], 4
      %s40 = int_to_ptr.vmem [resolvable:$true] %s39
      %45 = dma.hbm_to_vmem [thread:$0]  %s38, 256, %s40, [#allocation7], 128, 128, 8
    $region9: #{tpu_custom_call.1} parent=1 // pred_fallthru
      _
    // Predicated region
    $region10: #{tpu_custom_call.1} parent=1 // pred_check
      _
    $region11: #{tpu_custom_call.1} parent=1 // pred_check_branch
      %47 = sbr.rel (0) target = $region13
    $region12: #{tpu_custom_call.1} parent=1 // pred_region
      %48 = dma.done [#allocation4], 256
    $region13: #{tpu_custom_call.1} parent=1 // pred_fallthru
      _
    // Predicated region
    $region14: #{tpu_custom_call.1} parent=1 // pred_check
      _
    $region15: #{tpu_custom_call.1} parent=1 // pred_check_branch
      %50 = sbr.rel (0) target = $region17
    $region16: #{tpu_custom_call.1} parent=1 // pred_region
      %51 = dma.done [#allocation7], 256
    $region17: #{tpu_custom_call.1} parent=1 // pred_fallthru
      _
    %s52 = sadd.s32 0, 0
    %p53 = scmp.lt.s32.totalorder %s52, 0
    %s54 = scalar_select %p53, %s52, 0
    %s55 = smul.u32 2, %s54
    %s56 = sadd.s32 0, 0
    %p57 = scmp.lt.s32.totalorder %s56, 0
    %s58 = scalar_select %p57, %s56, 0
    %s59 = smul.u32 2, %s58
    %p60 = scmp.eq.s32.totalorder 0, 0
    // Predicated region
    $region18: #{tpu_custom_call.1} parent=1 // pred_check
      %p61 = pneg %p60
    $region19: #{tpu_custom_call.1} parent=1 // pred_check_branch
      %63 = sbr.rel (%p61) target = $region21
    $region20: #{tpu_custom_call.1} parent=1 // pred_region
      %64 = vst [vmem:[#allocation2] sm:$0xff] 0.0
      %65 = vst [vmem:[#allocation2 + $0x8] sm:$0xff] 0.0
    $region21: #{tpu_custom_call.1} parent=1 // pred_fallthru
      _
    %v66 = vld [vmem:[#allocation3] sm:$0xff]
    %v67 = vld [vmem:[#allocation3 + $0x8] sm:$0xff]
    %v68 = vld [vmem:[#allocation6] sm:$0xff]
    %v69 = vld [vmem:[#allocation6 + $0x8] sm:$0xff]
    %v70 = vsub.f32 %v66, %v68
    %v71 = vsub.f32 %v67, %v69
    %v72 = vmul.f32 %v70, %v70
    %v73 = vmul.f32 %v71, %v71
    %v74 = vld [vmem:[#allocation2] sm:$0xff]
    %v75 = vld [vmem:[#allocation2 + $0x8] sm:$0xff]
    %v76 = vadd.f32 %v74, %v72
    %v77 = vadd.f32 %v75, %v73
    %78 = vst [vmem:[#allocation2] sm:$0xff] %v76
    %79 = vst [vmem:[#allocation2 + $0x8] sm:$0xff] %v77
    // Predicated region
    $region22: #{tpu_custom_call.1} parent=1 // pred_check
      %p80 = pneg %p60
    $region23: #{tpu_custom_call.1} parent=1 // pred_check_branch
      %82 = sbr.rel (%p80) target = $region25
    $region24: #{tpu_custom_call.1} parent=1 // pred_region
      %v83 = vld [vmem:[#allocation2] sm:$0xff]
      %v84 = vld [vmem:[#allocation2 + $0x8] sm:$0xff]
      %v85 = vadd.f32 %v83, %v84
      %86 = vadd.xlane.f32.xlu0 %v85
      %v87 = vpop.xlane.xlu0 %86
      %v88 = vrot.slane %v87, 4
      %v89 = vadd.f32 %v87, %v88
      %v90 = vrot.slane %v89, 2
      %v91 = vadd.f32 %v89, %v90
      %v92 = vrot.slane %v91, 1
      %v93 = vadd.f32 %v91, %v92
      %s94 = vtos %v93
      %v95 = vstv %s94
      %vm96 = vcmask 0
      %97 = vst.msk [vmem:[#allocation8] sm:$0x1] %vm96, %v95
    $region25: #{tpu_custom_call.1} parent=1 // pred_fallthru
      _
    // Predicated region
    $region26: #{tpu_custom_call.1} parent=1 // pred_check
      _
    $region27: #{tpu_custom_call.1} parent=1 // pred_check_branch
      %99 = sbr.rel (0) target = $region29
    $region28: #{tpu_custom_call.1} parent=1 // pred_region
      %s101 = ssub.s32 16, 16
      %102 = vsyncadd [#allocation5], %s101
      %s104 = sshll.u32 [#allocation8], 4
      %s105 = int_to_ptr.vmem [resolvable:$true] %s104
      %107 = dma.vmem_to_hbm [thread:$0]  %s105, 16, %s2, [#allocation5]
    $region29: #{tpu_custom_call.1} parent=1 // pred_fallthru
      _
    // Predicated region
    $region30: #{tpu_custom_call.1} parent=1 // pred_check
      _
    $region31: #{tpu_custom_call.1} parent=1 // pred_check_branch
      %109 = sbr.rel (0) target = $region33
    $region32: #{tpu_custom_call.1} parent=1 // pred_region
      %110 = dma.done [#allocation5], 16
    $region33: #{tpu_custom_call.1} parent=1 // pred_fallthru
      _
    %111 = vsyncpa [#allocation4], 1
    %112 = vsyncpa [#allocation7], 1
    %113 = vsyncpa [#allocation5], 1

</llo_original>
